<compile_context>
chip_gen: v7x
topology: tpu7x:2x2x1
jax: 0.10.0
libtpu: 0.0.40
codegen_flags: <defaults>
</compile_context>

<pallas_src>
import functools

import jax
import jax.numpy as jnp
import numpy as np
from jax.experimental import pallas as pl
from jax.experimental.pallas import tpu as pltpu

# ---- small hyper-parameters consistent with the module ----------------------
IN_FEATURES = 16
RULES = 8
OUT_FEATURES = 4
BINARY = False          # if True the module forces out_features = 1
BATCH = 8

_OUT = 1 if BINARY else OUT_FEATURES


def _mamdani_litanfis_kernel(x_ref, mean_ref, std_ref, lit_ref,
                             w_ref, b_ref,
                             y_out_ref, rec_ref, ent_ref,
                             *, in_features, rules):
    # Lane-dense slabs, layout [b, f*rules + r].
    x = x_ref[...]                               # (TB, F*R)
    mean = mean_ref[...]                         # (1,  F*R)
    std = std_ref[...]                           # (1,  F*R)
    lit = jax.nn.sigmoid(lit_ref[...])           # (1,  F*R)

    # --- encode: gaussian membership + literal mix (1-2 vregs of EUP work) ---
    d = x - mean
    g = jnp.exp(-(d * d) / (2.0 * std * std))            # (TB, F*R)
    y3 = g * lit + (1.0 - g) * (1.0 - lit)                # (TB, F*R)
    log_y = jnp.log(y3 + 1e-10)                           # (TB, F*R)

    # --- grouped reduce over features ----------------------------------------
    # Rule r's lanes are {r, r+R, r+2R, ...}; that set is invariant under a
    # circular lane roll by any multiple of R, so a log2(F)-step roll/fold
    # leaves every lane holding its group's total (sum / max).  XLU rolls +
    # VPU adds on single vregs -- essentially free next to the EUP work above.
    s = log_y
    m = log_y
    h = (in_features // 2) * rules
    while h >= rules:
        s = s + pltpu.roll(s, shift=h, axis=1)
        m = jnp.maximum(m, pltpu.roll(m, shift=h, axis=1))
        h //= 2
    s = s[:, :rules]                             # (TB, R)  sum_f log_y
    m = m[:, :rules]                             # (TB, R)  max_f log_y

    # reference: y = exp(sum_f(log_y - max)) * exp(max) == exp(S - (F-1)*max)
    log_total = s - (in_features - 1.0) * m
    y = jnp.exp(log_total)                       # (TB, R)

    # entropy = -y * log(y); log(y) == log_total exactly (and NaN-free).
    ent_ref[...] = -y * log_total

    # --- L1 normalize over rules (F.normalize p=1 dim=1); y > 0 so |y| == y ---
    if rules > 1:
        denom = jnp.maximum(jnp.sum(y, axis=1, keepdims=True), 1e-12)
        y = y * (1.0 / denom)

    # --- fused decoder + mamdani projection: (TB,R) @ (R, F+O) + bias --------
    out = jnp.dot(y, w_ref[...], preferred_element_type=jnp.float32) + b_ref[...]
    rec_ref[...] = out[:, :in_features]          # decoder_linear output
    y_out_ref[...] = out[:, in_features:]        # mamdani_linear output


@jax.jit
def mamdani_litanfis_forward(x, params):
    B, F = x.shape
    R = params["mean"].shape[1]
    O = params["mam_w"].shape[0]
    assert params["mean"].shape[0] == F
    # the roll/fold feature reduce needs a power-of-two feature count
    assert F & (F - 1) == 0, "in_features must be a power of two"
    FR = F * R

    # Layout plumbing only (no compute hoisted out of the kernel):
    # x_slab[b, f*R + r] = x[b, f]; param rows flatten (F, R) row-major.
    # TODO(synk): for very large batches build the x repeat in-kernel to avoid
    # the R-fold HBM read amplification of x_rep.
    x_rep = jnp.repeat(x, R, axis=1)                       # (B, F*R)
    mean_row = params["mean"].reshape(1, FR)
    std_row = params["std"].reshape(1, FR)
    lit_row = params["literal"].reshape(1, FR)
    # Pre-transposed + fused projection weights (construction-time in a real module).
    w_cat = jnp.concatenate([params["dec_w"].T, params["mam_w"].T], axis=1)  # (R, F+O)
    b_cat = jnp.concatenate([params["dec_b"], params["mam_b"]], axis=1)      # (1, F+O)

    tile_b = B if B <= 512 else 512
    assert B % tile_b == 0
    grid = (B // tile_b,)

    row_spec = pl.BlockSpec((1, FR), lambda i: (0, 0))
    kernel = functools.partial(_mamdani_litanfis_kernel, in_features=F, rules=R)

    out_shapes = (
        jax.ShapeDtypeStruct((B, O), jnp.float32),     # y
        jax.ShapeDtypeStruct((B, F), jnp.float32),     # reconstructed_X
        jax.ShapeDtypeStruct((B, R), jnp.float32),     # entropy
    )
    return pl.pallas_call(
        kernel,
        out_shape=out_shapes,
        grid=grid,
        in_specs=[
            pl.BlockSpec((tile_b, FR), lambda i: (i, 0)),   # x slab (tiled over batch)
            row_spec, row_spec, row_spec,                   # mean / std / literal rows
            pl.BlockSpec((R, F + O), lambda i: (0, 0)),     # fused weights (resident)
            pl.BlockSpec((1, F + O), lambda i: (0, 0)),     # fused bias (resident)
        ],
        out_specs=(
            pl.BlockSpec((tile_b, O), lambda i: (i, 0)),
            pl.BlockSpec((tile_b, F), lambda i: (i, 0)),
            pl.BlockSpec((tile_b, R), lambda i: (i, 0)),
        ),
        compiler_params=pltpu.CompilerParams(
            dimension_semantics=("parallel",)),             # batch axis -> both TCs on v7x
    )(x_rep, mean_row, std_row, lit_row, w_cat, b_cat)


# ---- deterministic parameter construction (mirrors nn.Module __init__) ------
def init_params(key):
    ks = jax.random.split(key, 8)
    f32 = jnp.float32
    mean = jax.random.uniform(ks[0], (IN_FEATURES, RULES), f32)          # torch.rand
    std = jax.random.uniform(ks[1], (IN_FEATURES, RULES), f32)           # torch.rand
    literal = jax.random.normal(ks[2], (IN_FEATURES, RULES), f32) * 0.1  # randn*0.1
    # decoder_linear: Linear(rules -> in_features); PyTorch default U(-k, k), k=1/sqrt(fan_in)
    k_dec = 1.0 / np.sqrt(RULES)
    dec_w = jax.random.uniform(ks[3], (IN_FEATURES, RULES), f32, -k_dec, k_dec)
    dec_b = jax.random.uniform(ks[4], (1, IN_FEATURES), f32, -k_dec, k_dec)
    # mamdani_linear: Linear(rules -> out_features)
    k_mam = 1.0 / np.sqrt(RULES)
    mam_w = jax.random.uniform(ks[5], (_OUT, RULES), f32, -k_mam, k_mam)
    mam_b = jax.random.uniform(ks[6], (1, _OUT), f32, -k_mam, k_mam)
    # tsk_linear exists in the module but is unused by the Mamdani forward.
    return {"mean": mean, "std": std, "literal": literal,
            "dec_w": dec_w, "dec_b": dec_b, "mam_w": mam_w, "mam_b": mam_b}


# ---- pure-JAX reference (mirrors the PyTorch forward exactly) ----------------
def reference_forward(x, p):
    mean = p["mean"][None]                     # (1, F, R)
    std = p["std"][None]
    literal = jax.nn.sigmoid(p["literal"])[None]
    xe = x[:, :, None]
    g = jnp.exp(-(xe - mean) ** 2 / (2.0 * std ** 2))
    y3 = g * literal + (1.0 - g) * (1.0 - literal)
    log_y = jnp.log(y3 + 1e-10)
    max_log = jnp.max(log_y, axis=1, keepdims=True)
    y = jnp.exp(jnp.sum(log_y - max_log, axis=1)) * jnp.exp(max_log[:, 0, :])
    entropy = -y * jnp.log(y)
    if RULES > 1:
        y = y / jnp.maximum(jnp.sum(jnp.abs(y), axis=1, keepdims=True), 1e-12)
    reconstructed = y @ p["dec_w"].T + p["dec_b"]
    out = y @ p["mam_w"].T + p["mam_b"]
    return out, reconstructed, entropy


if __name__ == "__main__":
    key = jax.random.PRNGKey(0)
    k_param, k_x = jax.random.split(key)
    params = init_params(k_param)
    x = jax.random.normal(k_x, (BATCH, IN_FEATURES), jnp.float32)

    y, rec, ent = jax.block_until_ready(mamdani_litanfis_forward(x, params))

    y_ref, rec_ref, ent_ref = reference_forward(x, params)
    np.testing.assert_allclose(np.asarray(y), np.asarray(y_ref), rtol=1e-4, atol=1e-4)
    np.testing.assert_allclose(np.asarray(rec), np.asarray(rec_ref), rtol=1e-4, atol=1e-4)
    np.testing.assert_allclose(np.asarray(ent), np.asarray(ent_ref), rtol=1e-4, atol=1e-4)

    print("KERNEL_OK")
</pallas_src>

<mosaic_0001>
module attributes {stable_mosaic.version = 11 : i64} {
  func.func @_mamdani_litanfis_kernel(%arg0: i32, %arg1: memref<8x128xf32, #tpu.memory_space<vmem>>, %arg2: memref<1x128xf32, #tpu.memory_space<vmem>>, %arg3: memref<1x128xf32, #tpu.memory_space<vmem>>, %arg4: memref<1x128xf32, #tpu.memory_space<vmem>>, %arg5: memref<8x20xf32, #tpu.memory_space<vmem>>, %arg6: memref<1x20xf32, #tpu.memory_space<vmem>>, %arg7: memref<8x4xf32, #tpu.memory_space<vmem>>, %arg8: memref<8x16xf32, #tpu.memory_space<vmem>>, %arg9: memref<8x8xf32, #tpu.memory_space<vmem>>) attributes {dimension_semantics = [#tpu.dimension_semantics<parallel>], iteration_bounds = array<i64: 1>, scalar_prefetch = 0 : i64, scratch_operands = 0 : i64, tpu.core_type = #tpu.core_type<tc>, window_params = [{transform_indices = @transform_0, window_bounds = array<i64: 8, 128>}, {pipeline_mode = #tpu.pipeline_mode<synchronous>, transform_indices = @transform_1, window_bounds = array<i64: 1, 128>}, {pipeline_mode = #tpu.pipeline_mode<synchronous>, transform_indices = @transform_2, window_bounds = array<i64: 1, 128>}, {pipeline_mode = #tpu.pipeline_mode<synchronous>, transform_indices = @transform_3, window_bounds = array<i64: 1, 128>}, {pipeline_mode = #tpu.pipeline_mode<synchronous>, transform_indices = @transform_4, window_bounds = array<i64: 8, 20>}, {pipeline_mode = #tpu.pipeline_mode<synchronous>, transform_indices = @transform_5, window_bounds = array<i64: 1, 20>}, {transform_indices = @transform_6, window_bounds = array<i64: 8, 4>}, {transform_indices = @transform_7, window_bounds = array<i64: 8, 16>}, {transform_indices = @transform_8, window_bounds = array<i64: 8, 8>}]} {
    %c0 = arith.constant 0 : index
    %c0_0 = arith.constant 0 : index
    %0 = vector.load %arg1[%c0, %c0_0] : memref<8x128xf32, #tpu.memory_space<vmem>>, vector<8x128xf32>
    %c0_1 = arith.constant 0 : index
    %c0_2 = arith.constant 0 : index
    %1 = vector.load %arg2[%c0_1, %c0_2] : memref<1x128xf32, #tpu.memory_space<vmem>>, vector<1x128xf32>
    %c0_3 = arith.constant 0 : index
    %c0_4 = arith.constant 0 : index
    %2 = vector.load %arg3[%c0_3, %c0_4] : memref<1x128xf32, #tpu.memory_space<vmem>>, vector<1x128xf32>
    %c0_5 = arith.constant 0 : index
    %c0_6 = arith.constant 0 : index
    %3 = vector.load %arg4[%c0_5, %c0_6] : memref<1x128xf32, #tpu.memory_space<vmem>>, vector<1x128xf32>
    %4 = arith.negf %3 : vector<1x128xf32>
    %5 = math.exp %4 : vector<1x128xf32>
    %cst = arith.constant 1.000000e+00 : f32
    %6 = vector.broadcast %cst : f32 to vector<1x128xf32>
    %7 = arith.addf %6, %5 : vector<1x128xf32>
    %8 = arith.divf %6, %7 : vector<1x128xf32>
    %9 = vector.broadcast %1 : vector<1x128xf32> to vector<8x128xf32>
    %10 = arith.subf %0, %9 : vector<8x128xf32>
    %11 = arith.mulf %10, %10 : vector<8x128xf32>
    %cst_7 = arith.constant 0.000000e+00 : f32
    %12 = vector.broadcast %cst_7 : f32 to vector<8x128xf32>
    %13 = arith.subf %12, %11 : vector<8x128xf32>
    %cst_8 = arith.constant 2.000000e+00 : f32
    %14 = vector.broadcast %cst_8 : f32 to vector<1x128xf32>
    %15 = arith.mulf %14, %2 : vector<1x128xf32>
    %16 = arith.mulf %15, %2 : vector<1x128xf32>
    %17 = vector.broadcast %16 : vector<1x128xf32> to vector<8x128xf32>
    %18 = arith.divf %13, %17 : vector<8x128xf32>
    %19 = math.exp %18 : vector<8x128xf32>
    %20 = vector.broadcast %8 : vector<1x128xf32> to vector<8x128xf32>
    %21 = arith.mulf %19, %20 : vector<8x128xf32>
    %cst_9 = arith.constant 1.000000e+00 : f32
    %22 = vector.broadcast %cst_9 : f32 to vector<8x128xf32>
    %23 = arith.subf %22, %19 : vector<8x128xf32>
    %cst_10 = arith.constant 1.000000e+00 : f32
    %24 = vector.broadcast %cst_10 : f32 to vector<1x128xf32>
    %25 = arith.subf %24, %8 : vector<1x128xf32>
    %26 = vector.broadcast %25 : vector<1x128xf32> to vector<8x128xf32>
    %27 = arith.mulf %23, %26 : vector<8x128xf32>
    %28 = arith.addf %21, %27 : vector<8x128xf32>
    %cst_11 = arith.constant 1.000000e-10 : f32
    %29 = vector.broadcast %cst_11 : f32 to vector<8x128xf32>
    %30 = arith.addf %28, %29 : vector<8x128xf32>
    %31 = math.log %30 : vector<8x128xf32>
    %c64_i32 = arith.constant 64 : i32
    %32 = tpu.dynamic_rotate %31 by %c64_i32 dim 1 : vector<8x128xf32>, i32 -> vector<8x128xf32>
    %33 = arith.addf %31, %32 : vector<8x128xf32>
    %c64_i32_12 = arith.constant 64 : i32
    %34 = tpu.dynamic_rotate %31 by %c64_i32_12 dim 1 : vector<8x128xf32>, i32 -> vector<8x128xf32>
    %35 = arith.maximumf %31, %34 : vector<8x128xf32>
    %c32_i32 = arith.constant 32 : i32
    %36 = tpu.dynamic_rotate %33 by %c32_i32 dim 1 : vector<8x128xf32>, i32 -> vector<8x128xf32>
    %37 = arith.addf %33, %36 : vector<8x128xf32>
    %c32_i32_13 = arith.constant 32 : i32
    %38 = tpu.dynamic_rotate %35 by %c32_i32_13 dim 1 : vector<8x128xf32>, i32 -> vector<8x128xf32>
    %39 = arith.maximumf %35, %38 : vector<8x128xf32>
    %c16_i32 = arith.constant 16 : i32
    %40 = tpu.dynamic_rotate %37 by %c16_i32 dim 1 : vector<8x128xf32>, i32 -> vector<8x128xf32>
    %41 = arith.addf %37, %40 : vector<8x128xf32>
    %c16_i32_14 = arith.constant 16 : i32
    %42 = tpu.dynamic_rotate %39 by %c16_i32_14 dim 1 : vector<8x128xf32>, i32 -> vector<8x128xf32>
    %43 = arith.maximumf %39, %42 : vector<8x128xf32>
    %c8_i32 = arith.constant 8 : i32
    %44 = tpu.dynamic_rotate %41 by %c8_i32 dim 1 : vector<8x128xf32>, i32 -> vector<8x128xf32>
    %45 = arith.addf %41, %44 : vector<8x128xf32>
    %c8_i32_15 = arith.constant 8 : i32
    %46 = tpu.dynamic_rotate %43 by %c8_i32_15 dim 1 : vector<8x128xf32>, i32 -> vector<8x128xf32>
    %47 = arith.maximumf %43, %46 : vector<8x128xf32>
    %48 = vector.extract_strided_slice %45 {offsets = [0, 0], sizes = [8, 8], strides = [1, 1]} : vector<8x128xf32> to vector<8x8xf32>
    %49 = vector.extract_strided_slice %47 {offsets = [0, 0], sizes = [8, 8], strides = [1, 1]} : vector<8x128xf32> to vector<8x8xf32>
    %cst_16 = arith.constant 1.500000e+01 : f32
    %50 = vector.broadcast %cst_16 : f32 to vector<8x8xf32>
    %51 = arith.mulf %50, %49 : vector<8x8xf32>
    %52 = arith.subf %48, %51 : vector<8x8xf32>
    %53 = math.exp %52 : vector<8x8xf32>
    %cst_17 = arith.constant 0.000000e+00 : f32
    %54 = vector.broadcast %cst_17 : f32 to vector<8x8xf32>
    %55 = arith.subf %54, %53 : vector<8x8xf32>
    %56 = arith.mulf %55, %52 : vector<8x8xf32>
    %c0_18 = arith.constant 0 : index
    %c0_19 = arith.constant 0 : index
    %57 = vector.load %arg9[%c0_18, %c0_19] : memref<8x8xf32, #tpu.memory_space<vmem>>, vector<8x8xf32>
    tpu.vector_store %arg9[%c0_18, %c0_19], %56 {strides = array<i32>} : memref<8x8xf32, #tpu.memory_space<vmem>>, vector<8x8xf32>,
    %cst_20 = arith.constant dense<0.000000e+00> : vector<8xf32>
    %58 = vector.multi_reduction <add>, %53, %cst_20 [1] : vector<8x8xf32> to vector<8xf32>
    %59 = vector.shape_cast %58 : vector<8xf32> to vector<8x1xf32>
    %cst_21 = arith.constant 9.99999996E-13 : f32
    %60 = vector.broadcast %cst_21 : f32 to vector<8x1xf32>
    %61 = arith.maximumf %59, %60 : vector<8x1xf32>
    %cst_22 = arith.constant 1.000000e+00 : f32
    %62 = vector.broadcast %cst_22 : f32 to vector<8x1xf32>
    %63 = arith.divf %62, %61 : vector<8x1xf32>
    %64 = vector.broadcast %63 : vector<8x1xf32> to vector<8x8xf32>
    %65 = arith.mulf %53, %64 : vector<8x8xf32>
    %c0_23 = arith.constant 0 : index
    %c0_24 = arith.constant 0 : index
    %66 = vector.load %arg5[%c0_23, %c0_24] : memref<8x20xf32, #tpu.memory_space<vmem>>, vector<8x20xf32>
    %cst_25 = arith.constant dense<0.000000e+00> : vector<8x20xf32>
    %67 = tpu.matmul %65, %66, %cst_25 {dimension_numbers = #tpu.dot_dimension_numbers<[1], [0], [0], [1], [0, 0, 1, 1], [], []>} : vector<8x8xf32>, vector<8x20xf32>, vector<8x20xf32> -> vector<8x20xf32>
    %c0_26 = arith.constant 0 : index
    %c0_27 = arith.constant 0 : index
    %68 = vector.load %arg6[%c0_26, %c0_27] : memref<1x20xf32, #tpu.memory_space<vmem>>, vector<1x20xf32>
    %69 = vector.broadcast %68 : vector<1x20xf32> to vector<8x20xf32>
    %70 = arith.addf %67, %69 : vector<8x20xf32>
    %71 = vector.extract_strided_slice %70 {offsets = [0, 0], sizes = [8, 16], strides = [1, 1]} : vector<8x20xf32> to vector<8x16xf32>
    %c0_28 = arith.constant 0 : index
    %c0_29 = arith.constant 0 : index
    %72 = vector.load %arg8[%c0_28, %c0_29] : memref<8x16xf32, #tpu.memory_space<vmem>>, vector<8x16xf32>
    tpu.vector_store %arg8[%c0_28, %c0_29], %71 {strides = array<i32>} : memref<8x16xf32, #tpu.memory_space<vmem>>, vector<8x16xf32>,
    %73 = vector.extract_strided_slice %70 {offsets = [0, 16], sizes = [8, 4], strides = [1, 1]} : vector<8x20xf32> to vector<8x4xf32>
    %c0_30 = arith.constant 0 : index
    %c0_31 = arith.constant 0 : index
    %74 = vector.load %arg7[%c0_30, %c0_31] : memref<8x4xf32, #tpu.memory_space<vmem>>, vector<8x4xf32>
    tpu.vector_store %arg7[%c0_30, %c0_31], %73 {strides = array<i32>} : memref<8x4xf32, #tpu.memory_space<vmem>>, vector<8x4xf32>,
    return
  }
  func.func @transform_0(%arg0: i32) -> (i32, i32) {
    %c0_i32 = arith.constant 0 : i32
    %c0_i32_0 = arith.constant 0 : i32
    return %arg0, %c0_i32 : i32, i32
  }
  func.func @transform_1(%arg0: i32) -> (i32, i32) {
    %c0_i32 = arith.constant 0 : i32
    %c0_i32_0 = arith.constant 0 : i32
    %c0_i32_1 = arith.constant 0 : i32
    return %c0_i32, %c0_i32_0 : i32, i32
  }
  func.func @transform_2(%arg0: i32) -> (i32, i32) {
    %c0_i32 = arith.constant 0 : i32
    %c0_i32_0 = arith.constant 0 : i32
    %c0_i32_1 = arith.constant 0 : i32
    return %c0_i32, %c0_i32_0 : i32, i32
  }
  func.func @transform_3(%arg0: i32) -> (i32, i32) {
    %c0_i32 = arith.constant 0 : i32
    %c0_i32_0 = arith.constant 0 : i32
    %c0_i32_1 = arith.constant 0 : i32
    return %c0_i32, %c0_i32_0 : i32, i32
  }
  func.func @transform_4(%arg0: i32) -> (i32, i32) {
    %c0_i32 = arith.constant 0 : i32
    %c0_i32_0 = arith.constant 0 : i32
    %c0_i32_1 = arith.constant 0 : i32
    return %c0_i32, %c0_i32_0 : i32, i32
  }
  func.func @transform_5(%arg0: i32) -> (i32, i32) {
    %c0_i32 = arith.constant 0 : i32
    %c0_i32_0 = arith.constant 0 : i32
    %c0_i32_1 = arith.constant 0 : i32
    return %c0_i32, %c0_i32_0 : i32, i32
  }
  func.func @transform_6(%arg0: i32) -> (i32, i32) {
    %c0_i32 = arith.constant 0 : i32
    %c0_i32_0 = arith.constant 0 : i32
    return %arg0, %c0_i32 : i32, i32
  }
  func.func @transform_7(%arg0: i32) -> (i32, i32) {
    %c0_i32 = arith.constant 0 : i32
    %c0_i32_0 = arith.constant 0 : i32
    return %arg0, %c0_i32 : i32, i32
  }
  func.func @transform_8(%arg0: i32) -> (i32, i32) {
    %c0_i32 = arith.constant 0 : i32
    %c0_i32_0 = arith.constant 0 : i32
    return %arg0, %c0_i32 : i32, i32
  }
}

</mosaic_0001>

<llo_original>
// kernel: mamdani_litanfis_forward.1
$region0: #{mamdani_litanfis_forward.1}
  #allocation0 [shape = 'u32[]', space=smem, size = 0x4, offset = 0x4, fixed_abs, tag = 'smem constant byte address 0x4 - core index']
  #allocation1 [shape = 'u32[144,128]{1,0:T(1,128)}', space=vmem, size = 0x12000, scoped, tag = 'internal scratch']
  %s0 = inlined_call_operand.vmem [shape: f32[8,128], index: 0, kind: input, shape index: {}]
  %s1 = inlined_call_operand.vmem [shape: f32[1,128], index: 1, kind: input, shape index: {}]
  %s2 = inlined_call_operand.vmem [shape: f32[1,128], index: 2, kind: input, shape index: {}]
  %s3 = inlined_call_operand.vmem [shape: f32[1,128], index: 3, kind: input, shape index: {}]
  %s4 = inlined_call_operand.vmem [shape: f32[8,20], index: 4, kind: input, shape index: {}]
  %s5 = inlined_call_operand.vmem [shape: f32[1,20], index: 5, kind: input, shape index: {}]
  %s6 = inlined_call_operand.vmem [shape: f32[8,4], index: 6, kind: output, shape index: {0}]
  %s7 = inlined_call_operand.hbm [shape: f32[8,16], index: 7, kind: output, shape index: {1}]
  %s8 = inlined_call_operand.hbm [shape: f32[8,8], index: 8, kind: output, shape index: {2}]
  %9 = xla_tuple %s6, %s7, %s8
  %s10 = sld [smem:[#allocation0]]
  $region50: #{mamdani_litanfis_forward.1} parent=0
    _
  %s12 = ssub.s32 1, %s10
  %s13 = scalar_select 0, %s12, %s10
  $region1: #{mamdani_litanfis_forward.1} parent=0
    #allocation2 [shape = 'u8[4096]{0}', space=vmem, size = 0x1000, scoped, tag = 'output window, operand 1, single buffered']
    #allocation3 [shape = 's32[1]{0}', space=sflag, size = 0x4, scoped, tag = 'scoped memory for mamdani_litanfis_forward.1']
    #allocation4 [shape = 'u8[4096]{0}', space=vmem, size = 0x1000, scoped, tag = 'output window, operand 2, single buffered']
    #allocation5 [shape = 's32[1]{0}', space=sflag, size = 0x4, scoped, tag = 'scoped memory for mamdani_litanfis_forward.1']
    %14 = vsyncpa [#allocation3], 0
    %15 = vsyncpa [#allocation5], 0
    // Predicated region
    $region2: #{mamdani_litanfis_forward.1} parent=1 // pred_check
      _
    $region3: #{mamdani_litanfis_forward.1} parent=1 // pred_check_branch
      %17 = sbr.rel (0) target = $region5
    $region4: #{mamdani_litanfis_forward.1} parent=1 // pred_region
      _
    $region5: #{mamdani_litanfis_forward.1} parent=1 // pred_fallthru
      _
    // Predicated region
    $region6: #{mamdani_litanfis_forward.1} parent=1 // pred_check
      _
    $region7: #{mamdani_litanfis_forward.1} parent=1 // pred_check_branch
      %19 = sbr.rel (0) target = $region9
    $region8: #{mamdani_litanfis_forward.1} parent=1 // pred_region
      _
    $region9: #{mamdani_litanfis_forward.1} parent=1 // pred_fallthru
      _
    // Predicated region
    $region10: #{mamdani_litanfis_forward.1} parent=1 // pred_check
      _
    $region11: #{mamdani_litanfis_forward.1} parent=1 // pred_check_branch
      %21 = sbr.rel (0) target = $region13
    $region12: #{mamdani_litanfis_forward.1} parent=1 // pred_region
      _
    $region13: #{mamdani_litanfis_forward.1} parent=1 // pred_fallthru
      _
    // Predicated region
    $region14: #{mamdani_litanfis_forward.1} parent=1 // pred_check
      _
    $region15: #{mamdani_litanfis_forward.1} parent=1 // pred_check_branch
      %23 = sbr.rel (0) target = $region17
    $region16: #{mamdani_litanfis_forward.1} parent=1 // pred_region
      _
    $region17: #{mamdani_litanfis_forward.1} parent=1 // pred_fallthru
      _
    // Predicated region
    $region18: #{mamdani_litanfis_forward.1} parent=1 // pred_check
      _
    $region19: #{mamdani_litanfis_forward.1} parent=1 // pred_check_branch
      %25 = sbr.rel (0) target = $region21
    $region20: #{mamdani_litanfis_forward.1} parent=1 // pred_region
      _
    $region21: #{mamdani_litanfis_forward.1} parent=1 // pred_fallthru
      _
    // Predicated region
    $region22: #{mamdani_litanfis_forward.1} parent=1 // pred_check
      _
    $region23: #{mamdani_litanfis_forward.1} parent=1 // pred_check_branch
      %27 = sbr.rel (0) target = $region25
    $region24: #{mamdani_litanfis_forward.1} parent=1 // pred_region
      _
    $region25: #{mamdani_litanfis_forward.1} parent=1 // pred_fallthru
      _
    %v28 = vld [vmem:[%s0] sm:$0xff]
    %v29 = vld [vmem:[%s1] sm:$0x1]
    %v30 = vld [vmem:[%s2] sm:$0x1]
    %v31 = vld [vmem:[%s3] sm:$0x1]
    %v32 = vxor.u32 %v31, 2147483648
    %v33 = vmul.f32 %v32, 1.442695
    %v34 = vpow.pop %v33
    %v35 = vadd.f32 %v34, 1.0
    %v36 = vrcp.pop %v35
    %v37 = vmul.f32 1.0, %v36
    %v39 = vlaneseq
    %v40 = vshrl.u32 %v39, 7
    %v41 = vsub.s32 0, %v40
    %v42 = vrot.slane %v29, %v41
    %v44 = vsub.f32 %v28, %v42
    %v45 = vmul.f32 %v44, %v44
    %v46 = vsub.f32 0.0, %v45
    %v47 = vmul.f32 %v30, 2.0
    %v48 = vmul.f32 %v47, %v30
    %v50 = vlaneseq
    %v51 = vshrl.u32 %v50, 7
    %v52 = vsub.s32 0, %v51
    %v53 = vrot.slane %v48, %v52
    %v55 = vrcp.pop %v53
    %v56 = vmul.f32 %v46, %v55
    %v57 = vmul.f32 %v56, 1.442695
    %v58 = vpow.pop %v57
    %v60 = vlaneseq
    %v61 = vshrl.u32 %v60, 7
    %v62 = vsub.s32 0, %v61
    %v63 = vrot.slane %v37, %v62
    %v65 = vmul.f32 %v58, %v63
    %v66 = vsub.f32 1.0, %v58
    %v67 = vsub.f32 1.0, %v37
    %v69 = vlaneseq
    %v70 = vshrl.u32 %v69, 7
    %v71 = vsub.s32 0, %v70
    %v72 = vrot.slane %v67, %v71
    %v74 = vmul.f32 %v66, %v72
    %v75 = vadd.f32 %v65, %v74
    %v76 = vadd.f32 %v75, 1e-10
    %v77 = vlog2.pop %v76
    %v78 = vmul.f32 %v77, 0.6931472
    %79 = vrot.lane.b32.xlu0 %v78, 64
    %v80 = vpop.permute.xlu0 %79
    %v81 = vadd.f32 %v78, %v80
    %v82 = vmax.f32 %v78, %v80
    %83 = vrot.lane.b32.xlu0 %v81, 32
    %v84 = vpop.permute.xlu0 %83
    %v85 = vadd.f32 %v81, %v84
    %86 = vrot.lane.b32.xlu0 %v82, 32
    %v87 = vpop.permute.xlu0 %86
    %v88 = vmax.f32 %v82, %v87
    %89 = vrot.lane.b32.xlu0 %v85, 16
    %v90 = vpop.permute.xlu0 %89
    %v91 = vadd.f32 %v85, %v90
    %92 = vrot.lane.b32.xlu0 %v88, 16
    %v93 = vpop.permute.xlu0 %92
    %v94 = vmax.f32 %v88, %v93
    %95 = vrot.lane.b32.xlu0 %v91, 8
    %v96 = vpop.permute.xlu0 %95
    %v97 = vadd.f32 %v91, %v96
    %98 = vrot.lane.b32.xlu0 %v94, 8
    %v99 = vpop.permute.xlu0 %98
    %v100 = vmax.f32 %v94, %v99
    %v101 = vmul.f32 %v100, 15.0
    %v102 = vsub.f32 %v97, %v101
    %v103 = vmul.f32 %v102, 1.442695
    %v104 = vpow.pop %v103
    %v105 = vsub.f32 0.0, %v104
    %v106 = vmul.f32 %v105, %v102
    %vm107 = vcmask 64512
    %108 = vst.msk [vmem:[#allocation4] sm:$0xff] %vm107, %v106
    %v109 = vsel %vm107, %v104, 0.0
    %110 = vadd.xlane.f32.xlu0 %v109
    %v111 = vpop.xlane.xlu0 %110
    %v112 = vmax.f32 %v111, 1e-12
    %v113 = vrcp.pop %v112
    %v114 = vmul.f32 1.0, %v113
    %v115 = vmul.f32 %v104, %v114
    %v116 = vld [vmem:[%s4] sm:$0xff]
    %v117 = vld [vmem:[%s5] sm:$0x1]
    %v119 = vlaneseq
    %v120 = vshrl.u32 %v119, 7
    %v121 = vsub.s32 0, %v120
    %v122 = vrot.slane %v117, %v121
    %v125 = vsel %vm107, %v115, 0
    %127 = vmatprep.subr.mxu0 0.0
    %128 = vmatpush1.msra.mxu0 %v116
    %129 = vmatprep.subr.mxu0 0.0
    %130 = vmatpush1.msra.mxu0 0.0
    %131 = vmatprep.subr.mxu0 0.0
    %132 = vmatpush1.msra.mxu0 0.0
    %133 = vmatprep.subr.mxu0 0.0
    %134 = vmatpush1.msra.mxu0 0.0
    %135 = vmatprep.subr.mxu0 0.0
    %136 = vmatpush1.msra.mxu0 0.0
    %137 = vmatprep.subr.mxu0 0.0
    %138 = vmatpush1.msra.mxu0 0.0
    %139 = vmatprep.subr.mxu0 0.0
    %140 = vmatpush1.msra.mxu0 0.0
    %141 = vmatprep.subr.mxu0 0.0
    %142 = vmatpush1.msra.mxu0 0.0
    %143 = vmatprep.subr.mxu0 0.0
    %144 = vmatpush1.msra.mxu0 0.0
    %145 = vmatprep.subr.mxu0 0.0
    %146 = vmatpush1.msra.mxu0 0.0
    %147 = vmatprep.subr.mxu0 0.0
    %148 = vmatpush1.msra.mxu0 0.0
    %149 = vmatprep.subr.mxu0 0.0
    %150 = vmatpush1.msra.mxu0 0.0
    %151 = vmatprep.subr.mxu0 0.0
    %152 = vmatpush1.msra.mxu0 0.0
    %153 = vmatprep.subr.mxu0 0.0
    %154 = vmatpush1.msra.mxu0 0.0
    %155 = vmatprep.subr.mxu0 0.0
    %156 = vmatpush1.msra.mxu0 0.0
    %157 = vmatprep.subr.mxu0 0.0
    %158 = vmatpush1.msra.mxu0 0.0
    %159 = vmatprep.subr.mxu0 0.0
    %160 = vmatpush1.msra.mxu0 0.0
    %161 = vmatprep.subr.mxu0 0.0
    %162 = vmatpush1.msra.mxu0 0.0
    %163 = vmatprep.subr.mxu0 0.0
    %164 = vmatpush1.msra.mxu0 0.0
    %165 = vmatprep.subr.mxu0 0.0
    %166 = vmatpush1.msra.mxu0 0.0
    %167 = vmatprep.subr.mxu0 0.0
    %168 = vmatpush1.msra.mxu0 0.0
    %169 = vmatprep.subr.mxu0 0.0
    %170 = vmatpush1.msra.mxu0 0.0
    %171 = vmatprep.subr.mxu0 0.0
    %172 = vmatpush1.msra.mxu0 0.0
    %173 = vmatprep.subr.mxu0 0.0
    %174 = vmatpush1.msra.mxu0 0.0
    %175 = vmatprep.subr.mxu0 0.0
    %176 = vmatpush1.msra.mxu0 0.0
    %177 = vmatprep.subr.mxu0 0.0
    %178 = vmatpush1.msra.mxu0 0.0
    %179 = vmatprep.subr.mxu0 0.0
    %180 = vmatpush1.msra.mxu0 0.0
    %181 = vmatprep.subr.mxu0 0.0
    %182 = vmatpush1.msra.mxu0 0.0
    %183 = vmatprep.subr.mxu0 0.0
    %184 = vmatpush1.msra.mxu0 0.0
    %185 = vmatprep.subr.mxu0 0.0
    %186 = vmatpush1.msra.mxu0 0.0
    %187 = vmatprep.subr.mxu0 0.0
    %188 = vmatpush1.msra.mxu0 0.0
    %189 = vmatprep.subr.mxu0 0.0
    %190 = vmatpush1.msra.mxu0 0.0
    %191 = vmatprep.mubr.f32.mxu0 0.0
    %192 = vmatmul.mubr.f32.gmra.mrb[0].mxu0 %v125
    %v193 = vpop.f32.mrb[0].mxu0
    %v194 = vadd.f32 %v122, %v193
    %v195 = vpop.f32.mrb[0].mxu0
    %196 = vdwg.mxu0
    %vm197 = vcmask 130048
    %198 = vst.msk [vmem:[#allocation2] sm:$0xff] %vm197, %v194
    %200 = vrot.lane.b32.xlu0 %v194, 112
    %v201 = vpop.permute.xlu0 %200
    %vm203 = vcmask 31744
    %204 = vst.msk [vmem:[%s6] sm:$0xff] %vm203, %v201
    // Predicated region
    $region26: #{mamdani_litanfis_forward.1} parent=1 // pred_check
      _
    $region27: #{mamdani_litanfis_forward.1} parent=1 // pred_check_branch
      %206 = sbr.rel (0) target = $region29
    $region28: #{mamdani_litanfis_forward.1} parent=1 // pred_region
      _
    $region29: #{mamdani_litanfis_forward.1} parent=1 // pred_fallthru
      _
    // Predicated region
    $region30: #{mamdani_litanfis_forward.1} parent=1 // pred_check
      _
    $region31: #{mamdani_litanfis_forward.1} parent=1 // pred_check_branch
      %208 = sbr.rel (0) target = $region33
    $region32: #{mamdani_litanfis_forward.1} parent=1 // pred_region
      %s210 = ssub.s32 128, 128
      %211 = vsyncadd [#allocation3], %s210
      %s213 = sshll.u32 [#allocation2], 4
      %s214 = int_to_ptr.vmem [resolvable:$true] %s213
      %216 = dma.vmem_to_hbm [thread:$0]  %s214, 128, %s7, [#allocation3]
    $region33: #{mamdani_litanfis_forward.1} parent=1 // pred_fallthru
      _
    // Predicated region
    $region34: #{mamdani_litanfis_forward.1} parent=1 // pred_check
      _
    $region35: #{mamdani_litanfis_forward.1} parent=1 // pred_check_branch
      %218 = sbr.rel (0) target = $region37
    $region36: #{mamdani_litanfis_forward.1} parent=1 // pred_region
      %s220 = ssub.s32 128, 128
      %221 = vsyncadd [#allocation5], %s220
      %s223 = sshll.u32 [#allocation4], 4
      %s224 = int_to_ptr.vmem [resolvable:$true] %s223
      %226 = dma.vmem_to_hbm [thread:$0]  %s224, 128, %s8, [#allocation5]
    $region37: #{mamdani_litanfis_forward.1} parent=1 // pred_fallthru
      _
    // Predicated region
    $region38: #{mamdani_litanfis_forward.1} parent=1 // pred_check
      _
    $region39: #{mamdani_litanfis_forward.1} parent=1 // pred_check_branch
      %228 = sbr.rel (0) target = $region41
    $region40: #{mamdani_litanfis_forward.1} parent=1 // pred_region
      _
    $region41: #{mamdani_litanfis_forward.1} parent=1 // pred_fallthru
      _
    // Predicated region
    $region42: #{mamdani_litanfis_forward.1} parent=1 // pred_check
      _
    $region43: #{mamdani_litanfis_forward.1} parent=1 // pred_check_branch
      %230 = sbr.rel (0) target = $region45
    $region44: #{mamdani_litanfis_forward.1} parent=1 // pred_region
      %231 = dma.done [#allocation3], 128
    $region45: #{mamdani_litanfis_forward.1} parent=1 // pred_fallthru
      _
    // Predicated region
    $region46: #{mamdani_litanfis_forward.1} parent=1 // pred_check
      _
    $region47: #{mamdani_litanfis_forward.1} parent=1 // pred_check_branch
      %233 = sbr.rel (0) target = $region49
    $region48: #{mamdani_litanfis_forward.1} parent=1 // pred_region
      %234 = dma.done [#allocation5], 128
    $region49: #{mamdani_litanfis_forward.1} parent=1 // pred_fallthru
      _
    %235 = vsyncpa [#allocation3], 1
    %236 = vsyncpa [#allocation5], 1

</llo_original>
